<compile_context>
chip_gen: v7x
topology: tpu7x:2x2x1
jax: 0.10.0
libtpu: 0.0.40
codegen_flags: <defaults>
</compile_context>

<pallas_src>
import jax
import jax.numpy as jnp
from jax.experimental import pallas as pl
from jax.experimental.pallas import tpu as pltpu


def _round_up(x, m):
    return ((x + m - 1) // m) * m


def _pick_tile(dim, want, unit):
    """Largest multiple of `unit` that is <= min(want, dim) and divides `dim`.

    Assumes dim % unit == 0 (so the loop always terminates at `unit`)."""
    t = max(unit, (min(want, dim) // unit) * unit)
    while dim % t != 0:
        t -= unit
    return t


# --------------------------------- kernels ---------------------------------

def _decoder_kernel_kgrid(x_ref, w_ref, b_ref, o_ref):
    """K is the innermost grid axis; accumulate directly into the resident
    f32 output tile (no scratch accumulator)."""
    k = pl.program_id(2)

    @pl.when(k == 0)
    def _init():
        o_ref[...] = jnp.zeros_like(o_ref)

    o_ref[...] += jnp.dot(x_ref[...], w_ref[...],
                          preferred_element_type=jnp.float32)

    @pl.when(k == pl.num_programs(2) - 1)
    def _epilogue():
        y = o_ref[...] + b_ref[...]                     # (1, tn) -> (tm, tn)
        o_ref[...] = jnp.maximum(y, 0.2 * y)            # LeakyReLU(0.2)


def _decoder_kernel_fullk(x_ref, w_ref, b_ref, o_ref):
    """Full-K in one shot: no zero-init, no read-modify-write on the output."""
    y = jnp.dot(x_ref[...], w_ref[...],
                preferred_element_type=jnp.float32) + b_ref[...]
    o_ref[...] = jnp.maximum(y, 0.2 * y)


# --------------------------------- wrapper ----------------------------------

def decoder_forward(x, w, b, *, tm=512, tn=512, tk=1024, use_bf16_matmul=False):
    """Decoder forward: LeakyReLU_0.2(x @ w + b).

    x: (B, L) f32, w: (L, O) f32, b: (O,) f32  ->  (B, O) f32.
    """
    B, L = x.shape
    L2, O = w.shape
    assert L == L2 and b.shape == (O,)

    # ---- K (latent) tiling: never pad K; small/ragged K -> full-K block. ----
    if L % 128 != 0 or L <= tk:
        tk = L
    else:
        tk = _pick_tile(L, tk, 128)
    nk = L // tk

    # ---- N (output) tiling: never pad N (W stream dominates HBM traffic). ----
    if O % 128 != 0:
        tn = O
    else:
        tn = _pick_tile(O, tn, 128)

    # ---- M (batch) tiling: pad only activation rows, only when ragged. ----
    if B % 8 != 0 and B <= tm:
        tm, Mp = B, B                                    # full-dim block, no pad
    else:
        Mp = _round_up(B, 8)
        tm = _pick_tile(Mp, tm, 8)

    # v7x has 2 TensorCores: ensure at least one "parallel" axis has >=2 blocks
    # when the problem allows it (no-op on v5e/v6e).
    if Mp // tm == 1 and O % 128 == 0 and O // tn == 1 and O >= 256:
        tn = _pick_tile(O, max(128, (O // 2 // 128) * 128), 128)

    nm, nn = Mp // tm, O // tn

    xp = jnp.pad(x, ((0, Mp - B), (0, 0))) if Mp != B else x
    wp = w
    bp = b.reshape(1, O)

    if use_bf16_matmul:
        # v6e/v7x fast path: bf16 MXU inputs, f32 accumulation.  In production,
        # pre-cast the (constant) weight once outside the hot path instead.
        xp = xp.astype(jnp.bfloat16)
        wp = wp.astype(jnp.bfloat16)

    # VMEM budget (double-buffered inputs + resident/double-buffered output).
    itemsize = 2 if use_bf16_matmul else 4
    vmem_need = 2 * (tm * tk + tk * tn) * itemsize + 2 * tm * tn * 4 + 2 * tn * 4
    cp_kwargs = {}
    if vmem_need > 12 * 1024 * 1024:
        # Raise the scoped-VMEM limit only as far as needed; cap at v7x's 64 MiB.
        cp_kwargs["vmem_limit_bytes"] = min(64 * 1024 * 1024, (vmem_need * 3) // 2)

    cost = pl.CostEstimate(
        flops=2 * B * L * O,
        transcendentals=0,
        bytes_accessed=(B * L + L * O + O + B * O) * 4,
    )

    if nk == 1:
        grid = (nm, nn)
        kernel = _decoder_kernel_fullk
        in_specs = [
            pl.BlockSpec((tm, tk), lambda i, j: (i, 0)),   # x tile
            pl.BlockSpec((tk, tn), lambda i, j: (0, j)),   # w tile
            pl.BlockSpec((1, tn), lambda i, j: (0, j)),    # bias tile
        ]
        out_specs = pl.BlockSpec((tm, tn), lambda i, j: (i, j))
        dims = ("parallel", "parallel")
    else:
        grid = (nm, nn, nk)                                # reduction axis last
        kernel = _decoder_kernel_kgrid
        in_specs = [
            pl.BlockSpec((tm, tk), lambda i, j, k: (i, k)),
            pl.BlockSpec((tk, tn), lambda i, j, k: (k, j)),
            pl.BlockSpec((1, tn), lambda i, j, k: (0, j)),
        ]
        out_specs = pl.BlockSpec((tm, tn), lambda i, j, k: (i, j))
        dims = ("parallel", "parallel", "arbitrary")

    out = pl.pallas_call(
        kernel,
        out_shape=jax.ShapeDtypeStruct((Mp, O), jnp.float32),
        grid=grid,
        in_specs=in_specs,
        out_specs=out_specs,
        compiler_params=pltpu.CompilerParams(dimension_semantics=dims, **cp_kwargs),
        cost_estimate=cost,
    )(xp, wp, bp)

    return out[:B] if Mp != B else out


def reference_forward(x, w, b):
    y = jax.lax.dot_general(
        x, w, (((1,), (0,)), ((), ())), precision=jax.lax.Precision.HIGHEST
    ) + b[None, :]
    return jnp.where(y > 0, y, 0.2 * y)


if __name__ == "__main__":
    key = jax.random.PRNGKey(0)
    k1, k2, k3, k4, k5, k6, k7, k8, k9, k10, k11, k12 = jax.random.split(key, 12)

    # --- 1) Toy shape from the module (latent_dim=32, output_dim=64): full-K,
    #        full-N blocks, no padding anywhere, single-shot kernel. ---
    batch, latent_dim, hidden_dim, output_dim = 8, 32, 16, 64  # hidden_dim unused by Decoder
    x = jax.random.normal(k1, (batch, latent_dim), dtype=jnp.float32)
    bound = 1.0 / (latent_dim ** 0.5)
    w = jax.random.uniform(k2, (latent_dim, output_dim), jnp.float32, -bound, bound)
    b = jax.random.uniform(k3, (output_dim,), jnp.float32, -bound, bound)

    out = jax.block_until_ready(decoder_forward(x, w, b))
    ref = reference_forward(x, w, b)
    assert out.shape == (batch, output_dim)
    assert jnp.allclose(out, ref, atol=1e-5, rtol=1e-5), "toy-shape mismatch vs reference"

    # --- 2) Multi-tile K-grid path: exercises accumulate-into-output across K
    #        and the (3, 3, 2) parallel/arbitrary grid. ---
    B2, L2_, O2 = 192, 256, 384
    x2 = jax.random.normal(k4, (B2, L2_), dtype=jnp.float32)
    w2 = jax.random.normal(k5, (L2_, O2), dtype=jnp.float32) * 0.05
    b2 = jax.random.normal(k6, (O2,), dtype=jnp.float32) * 0.05
    out2 = jax.block_until_ready(decoder_forward(x2, w2, b2, tm=64, tn=128, tk=128))
    ref2 = reference_forward(x2, w2, b2)
    assert out2.shape == (B2, O2)
    assert jnp.allclose(out2, ref2, atol=1e-4, rtol=1e-4), "K-grid mismatch vs reference"

    # --- 3) Ragged M (padding + final slice) with ragged K/N handled via
    #        full-dim blocks (no K/N padding). ---
    B3, L3, O3 = 132, 96, 200
    x3 = jax.random.normal(k7, (B3, L3), dtype=jnp.float32)
    w3 = jax.random.normal(k8, (L3, O3), dtype=jnp.float32) * 0.05
    b3 = jax.random.normal(k9, (O3,), dtype=jnp.float32) * 0.05
    out3 = jax.block_until_ready(decoder_forward(x3, w3, b3, tm=64))
    ref3 = reference_forward(x3, w3, b3)
    assert out3.shape == (B3, O3)
    assert jnp.allclose(out3, ref3, atol=1e-4, rtol=1e-4), "ragged-M mismatch vs reference"

    # --- 4) bf16 MXU-input path (v6e/v7x fast path), validated against an
    #        f32 reference on bf16-rounded inputs. ---
    B4, L4, O4 = 64, 256, 256
    x4 = jax.random.normal(k10, (B4, L4), dtype=jnp.float32)
    w4 = jax.random.normal(k11, (L4, O4), dtype=jnp.float32) * 0.05
    b4 = jax.random.normal(k12, (O4,), dtype=jnp.float32) * 0.05
    out4 = jax.block_until_ready(decoder_forward(x4, w4, b4, use_bf16_matmul=True))
    ref4 = reference_forward(x4.astype(jnp.bfloat16).astype(jnp.float32),
                             w4.astype(jnp.bfloat16).astype(jnp.float32), b4)
    assert out4.shape == (B4, O4)
    assert jnp.allclose(out4, ref4, atol=1e-2, rtol=1e-2), "bf16-path mismatch vs reference"

    # TODO(synk): at the toy 8x32x64 size this module is overhead-bound as a
    # standalone kernel; in production, fuse it into the surrounding graph (or
    # batch many decoder calls), pre-cast W to bf16 once, and consider an fp8
    # weight path on v7x.

    print("KERNEL_OK")
</pallas_src>

<mosaic_0001>
module attributes {stable_mosaic.version = 11 : i64} {
  func.func @_decoder_kernel_fullk(%arg0: i32, %arg1: i32, %arg2: memref<8x32xf32, #tpu.memory_space<vmem>>, %arg3: memref<32x64xf32, #tpu.memory_space<vmem>>, %arg4: memref<1x64xf32, #tpu.memory_space<vmem>>, %arg5: memref<8x64xf32, #tpu.memory_space<vmem>>) attributes {dimension_semantics = [#tpu.dimension_semantics<parallel>, #tpu.dimension_semantics<parallel>], iteration_bounds = array<i64: 1, 1>, scalar_prefetch = 0 : i64, scratch_operands = 0 : i64, tpu.core_type = #tpu.core_type<tc>, window_params = [{transform_indices = @transform_0, window_bounds = array<i64: 8, 32>}, {transform_indices = @transform_1, window_bounds = array<i64: 32, 64>}, {transform_indices = @transform_2, window_bounds = array<i64: 1, 64>}, {transform_indices = @transform_3, window_bounds = array<i64: 8, 64>}]} {
    %c0 = arith.constant 0 : index
    %c0_0 = arith.constant 0 : index
    %0 = vector.load %arg2[%c0, %c0_0] : memref<8x32xf32, #tpu.memory_space<vmem>>, vector<8x32xf32>
    %c0_1 = arith.constant 0 : index
    %c0_2 = arith.constant 0 : index
    %1 = vector.load %arg3[%c0_1, %c0_2] : memref<32x64xf32, #tpu.memory_space<vmem>>, vector<32x64xf32>
    %cst = arith.constant dense<0.000000e+00> : vector<8x64xf32>
    %2 = tpu.matmul %0, %1, %cst {dimension_numbers = #tpu.dot_dimension_numbers<[1], [0], [0], [1], [0, 0, 1, 1], [], []>} : vector<8x32xf32>, vector<32x64xf32>, vector<8x64xf32> -> vector<8x64xf32>
    %c0_3 = arith.constant 0 : index
    %c0_4 = arith.constant 0 : index
    %3 = vector.load %arg4[%c0_3, %c0_4] : memref<1x64xf32, #tpu.memory_space<vmem>>, vector<1x64xf32>
    %4 = vector.broadcast %3 : vector<1x64xf32> to vector<8x64xf32>
    %5 = arith.addf %2, %4 : vector<8x64xf32>
    %cst_5 = arith.constant 2.000000e-01 : f32
    %6 = vector.broadcast %cst_5 : f32 to vector<8x64xf32>
    %7 = arith.mulf %6, %5 : vector<8x64xf32>
    %8 = arith.maximumf %5, %7 : vector<8x64xf32>
    %c0_6 = arith.constant 0 : index
    %c0_7 = arith.constant 0 : index
    %9 = vector.load %arg5[%c0_6, %c0_7] : memref<8x64xf32, #tpu.memory_space<vmem>>, vector<8x64xf32>
    tpu.vector_store %arg5[%c0_6, %c0_7], %8 {strides = array<i32>} : memref<8x64xf32, #tpu.memory_space<vmem>>, vector<8x64xf32>,
    return
  }
  func.func @transform_0(%arg0: i32, %arg1: i32) -> (i32, i32) {
    %c0_i32 = arith.constant 0 : i32
    %c0_i32_0 = arith.constant 0 : i32
    return %arg0, %c0_i32 : i32, i32
  }
  func.func @transform_1(%arg0: i32, %arg1: i32) -> (i32, i32) {
    %c0_i32 = arith.constant 0 : i32
    %c0_i32_0 = arith.constant 0 : i32
    return %c0_i32, %arg1 : i32, i32
  }
  func.func @transform_2(%arg0: i32, %arg1: i32) -> (i32, i32) {
    %c0_i32 = arith.constant 0 : i32
    %c0_i32_0 = arith.constant 0 : i32
    return %c0_i32, %arg1 : i32, i32
  }
  func.func @transform_3(%arg0: i32, %arg1: i32) -> (i32, i32) {
    %c0_i32 = arith.constant 0 : i32
    return %arg0, %arg1 : i32, i32
  }
}

</mosaic_0001>

<llo_original>
// kernel: tpu_custom_call.1
$region0: #{tpu_custom_call.1}
  #allocation0 [shape = 'u32[]', space=smem, size = 0x4, offset = 0x4, fixed_abs, tag = 'smem constant byte address 0x4 - core index']
  #allocation1 [shape = 'u32[144,128]{1,0:T(1,128)}', space=vmem, size = 0x12000, scoped, tag = 'internal scratch']
  %s0 = inlined_call_operand.hbm [shape: f32[8,32], index: 0, kind: input, shape index: {}]
  %s1 = inlined_call_operand.hbm [shape: f32[32,64], index: 1, kind: input, shape index: {}]
  %s2 = inlined_call_operand.vmem [shape: f32[1,64], index: 2, kind: input, shape index: {}]
  %s3 = inlined_call_operand.hbm [shape: f32[8,64], index: 3, kind: output, shape index: {}]
  %s4 = sld [smem:[#allocation0]]
  $region30: #{tpu_custom_call.1} parent=0
    _
  %s6 = ssub.s32 1, %s4
  %s7 = scalar_select 0, %s6, %s4
  $region1: #{tpu_custom_call.1} parent=0
    #allocation2 [shape = 'u8[4096]{0}', space=vmem, size = 0x1000, scoped, tag = 'input window, operand 0, single buffered']
    #allocation3 [shape = 's32[1]{0}', space=sflag, size = 0x4, scoped, tag = 'scoped memory for tpu_custom_call.1']
    #allocation4 [shape = 's32[1]{0}', space=sflag, size = 0x4, scoped, tag = 'scoped memory for tpu_custom_call.1']
    #allocation5 [shape = 'u8[16384]{0}', space=vmem, size = 0x4000, scoped, tag = 'input window, operand 1, single buffered']
    #allocation6 [shape = 's32[1]{0}', space=sflag, size = 0x4, scoped, tag = 'scoped memory for tpu_custom_call.1']
    #allocation7 [shape = 'u8[4096]{0}', space=vmem, size = 0x1000, scoped, tag = 'output window, operand 0, single buffered']
    %8 = vsyncpa [#allocation3], 0
    %9 = vsyncpa [#allocation6], 0
    %10 = vsyncpa [#allocation4], 0
    // Predicated region
    $region2: #{tpu_custom_call.1} parent=1 // pred_check
      _
    $region3: #{tpu_custom_call.1} parent=1 // pred_check_branch
      %12 = sbr.rel (0) target = $region5
    $region4: #{tpu_custom_call.1} parent=1 // pred_region
      %s14 = ssub.s32 128, 128
      %15 = vsyncadd [#allocation3], %s14
      %s17 = sshll.u32 [#allocation2], 4
      %s18 = int_to_ptr.vmem [resolvable:$true] %s17
      %20 = dma.hbm_to_vmem [thread:$0]  %s0, 128, %s18, [#allocation3]
    $region5: #{tpu_custom_call.1} parent=1 // pred_fallthru
      _
    // Predicated region
    $region6: #{tpu_custom_call.1} parent=1 // pred_check
      _
    $region7: #{tpu_custom_call.1} parent=1 // pred_check_branch
      %22 = sbr.rel (0) target = $region9
    $region8: #{tpu_custom_call.1} parent=1 // pred_region
      %s24 = ssub.s32 512, 512
      %25 = vsyncadd [#allocation6], %s24
      %s26 = sshll.u32 [#allocation5], 4
      %s27 = int_to_ptr.vmem [resolvable:$true] %s26
      %32 = dma.hbm_to_vmem [thread:$0]  %s1, 512, %s27, [#allocation6], 128, 128, 8
    $region9: #{tpu_custom_call.1} parent=1 // pred_fallthru
      _
    // Predicated region
    $region10: #{tpu_custom_call.1} parent=1 // pred_check
      _
    $region11: #{tpu_custom_call.1} parent=1 // pred_check_branch
      %34 = sbr.rel (0) target = $region13
    $region12: #{tpu_custom_call.1} parent=1 // pred_region
      _
    $region13: #{tpu_custom_call.1} parent=1 // pred_fallthru
      _
    // Predicated region
    $region14: #{tpu_custom_call.1} parent=1 // pred_check
      _
    $region15: #{tpu_custom_call.1} parent=1 // pred_check_branch
      %36 = sbr.rel (0) target = $region17
    $region16: #{tpu_custom_call.1} parent=1 // pred_region
      %37 = dma.done [#allocation3], 128
    $region17: #{tpu_custom_call.1} parent=1 // pred_fallthru
      _
    // Predicated region
    $region18: #{tpu_custom_call.1} parent=1 // pred_check
      _
    $region19: #{tpu_custom_call.1} parent=1 // pred_check_branch
      %39 = sbr.rel (0) target = $region21
    $region20: #{tpu_custom_call.1} parent=1 // pred_region
      %40 = dma.done [#allocation6], 512
    $region21: #{tpu_custom_call.1} parent=1 // pred_fallthru
      _
    %v41 = vld [vmem:[#allocation2] sm:$0xff]
    %v42 = vld [vmem:[#allocation5] sm:$0xff]
    %v43 = vld [vmem:[#allocation5 + $0x8] sm:$0xff]
    %v44 = vld [vmem:[#allocation5 + $0x10] sm:$0xff]
    %v45 = vld [vmem:[#allocation5 + $0x18] sm:$0xff]
    %v46 = vld [vmem:[%s2] sm:$0x1]
    %v48 = vlaneseq
    %v49 = vshrl.u32 %v48, 7
    %v50 = vsub.s32 0, %v49
    %v51 = vrot.slane %v46, %v50
    %vm53 = vcmask 261120
    %v55 = vsel %vm53, %v41, 0
    %57 = vmatprep.subr.mxu0 0.0
    %58 = vmatpush1.msra.mxu0 %v42
    %59 = vmatprep.subr.mxu0 0.0
    %60 = vmatpush1.msra.mxu0 %v43
    %61 = vmatprep.subr.mxu0 0.0
    %62 = vmatpush1.msra.mxu0 %v44
    %63 = vmatprep.subr.mxu0 0.0
    %64 = vmatpush1.msra.mxu0 %v45
    %65 = vmatprep.subr.mxu0 0.0
    %66 = vmatpush1.msra.mxu0 0.0
    %67 = vmatprep.subr.mxu0 0.0
    %68 = vmatpush1.msra.mxu0 0.0
    %69 = vmatprep.subr.mxu0 0.0
    %70 = vmatpush1.msra.mxu0 0.0
    %71 = vmatprep.subr.mxu0 0.0
    %72 = vmatpush1.msra.mxu0 0.0
    %73 = vmatprep.subr.mxu0 0.0
    %74 = vmatpush1.msra.mxu0 0.0
    %75 = vmatprep.subr.mxu0 0.0
    %76 = vmatpush1.msra.mxu0 0.0
    %77 = vmatprep.subr.mxu0 0.0
    %78 = vmatpush1.msra.mxu0 0.0
    %79 = vmatprep.subr.mxu0 0.0
    %80 = vmatpush1.msra.mxu0 0.0
    %81 = vmatprep.subr.mxu0 0.0
    %82 = vmatpush1.msra.mxu0 0.0
    %83 = vmatprep.subr.mxu0 0.0
    %84 = vmatpush1.msra.mxu0 0.0
    %85 = vmatprep.subr.mxu0 0.0
    %86 = vmatpush1.msra.mxu0 0.0
    %87 = vmatprep.subr.mxu0 0.0
    %88 = vmatpush1.msra.mxu0 0.0
    %89 = vmatprep.subr.mxu0 0.0
    %90 = vmatpush1.msra.mxu0 0.0
    %91 = vmatprep.subr.mxu0 0.0
    %92 = vmatpush1.msra.mxu0 0.0
    %93 = vmatprep.subr.mxu0 0.0
    %94 = vmatpush1.msra.mxu0 0.0
    %95 = vmatprep.subr.mxu0 0.0
    %96 = vmatpush1.msra.mxu0 0.0
    %97 = vmatprep.subr.mxu0 0.0
    %98 = vmatpush1.msra.mxu0 0.0
    %99 = vmatprep.subr.mxu0 0.0
    %100 = vmatpush1.msra.mxu0 0.0
    %101 = vmatprep.subr.mxu0 0.0
    %102 = vmatpush1.msra.mxu0 0.0
    %103 = vmatprep.subr.mxu0 0.0
    %104 = vmatpush1.msra.mxu0 0.0
    %105 = vmatprep.subr.mxu0 0.0
    %106 = vmatpush1.msra.mxu0 0.0
    %107 = vmatprep.subr.mxu0 0.0
    %108 = vmatpush1.msra.mxu0 0.0
    %109 = vmatprep.subr.mxu0 0.0
    %110 = vmatpush1.msra.mxu0 0.0
    %111 = vmatprep.subr.mxu0 0.0
    %112 = vmatpush1.msra.mxu0 0.0
    %113 = vmatprep.subr.mxu0 0.0
    %114 = vmatpush1.msra.mxu0 0.0
    %115 = vmatprep.subr.mxu0 0.0
    %116 = vmatpush1.msra.mxu0 0.0
    %117 = vmatprep.subr.mxu0 0.0
    %118 = vmatpush1.msra.mxu0 0.0
    %119 = vmatprep.subr.mxu0 0.0
    %120 = vmatpush1.msra.mxu0 0.0
    %121 = vmatprep.mubr.f32.mxu0 0.0
    %122 = vmatmul.mubr.f32.gmra.mrb[0].mxu0 %v55
    %v123 = vpop.f32.mrb[0].mxu0
    %v124 = vadd.f32 %v51, %v123
    %v125 = vpop.f32.mrb[0].mxu0
    %126 = vdwg.mxu0
    %v127 = vmul.f32 %v124, 0.2
    %v128 = vmax.f32 %v124, %v127
    %vm129 = vcmask 523264
    %130 = vst.msk [vmem:[#allocation7] sm:$0xff] %vm129, %v128
    // Predicated region
    $region22: #{tpu_custom_call.1} parent=1 // pred_check
      _
    $region23: #{tpu_custom_call.1} parent=1 // pred_check_branch
      %132 = sbr.rel (0) target = $region25
    $region24: #{tpu_custom_call.1} parent=1 // pred_region
      %s134 = ssub.s32 128, 128
      %135 = vsyncadd [#allocation4], %s134
      %s137 = sshll.u32 [#allocation7], 4
      %s138 = int_to_ptr.vmem [resolvable:$true] %s137
      %140 = dma.vmem_to_hbm [thread:$0]  %s138, 128, %s3, [#allocation4]
    $region25: #{tpu_custom_call.1} parent=1 // pred_fallthru
      _
    // Predicated region
    $region26: #{tpu_custom_call.1} parent=1 // pred_check
      _
    $region27: #{tpu_custom_call.1} parent=1 // pred_check_branch
      %142 = sbr.rel (0) target = $region29
    $region28: #{tpu_custom_call.1} parent=1 // pred_region
      %143 = dma.done [#allocation4], 128
    $region29: #{tpu_custom_call.1} parent=1 // pred_fallthru
      _
    %144 = vsyncpa [#allocation3], 1
    %145 = vsyncpa [#allocation6], 1
    %146 = vsyncpa [#allocation4], 1

</llo_original>
